<compile_context>
chip_gen: v7x
topology: tpu7x:2x2x1
jax: 0.10.0
libtpu: 0.0.40
codegen_flags: <defaults>
</compile_context>

<pallas_src>
import functools

import jax
import jax.numpy as jnp
from jax import lax
from jax.experimental import pallas as pl
from jax.experimental.pallas import tpu as pltpu


# Contract the last axis of both operands: F @ F^T ("NT" matmul dims).
_NT_DIMS = (((1,), (1,)), ((), ()))

# Total VMEM we are willing to plan against (vmem_limit_bytes is set to 32 MiB,
# which is safe on v5e/v6e/v7x; we budget to 24 MiB to leave compiler headroom).
_VMEM_PLAN_BYTES = 24 << 20
_VMEM_LIMIT_BYTES = 32 << 20

# Below this feature-map size, plain jnp (XLA fusion) beats kernel launch/DMA
# setup overhead.
_SMALL_PROBLEM_BYTES = 2 << 20


def _gram_kernel(f_ref, o_ref, acc_ref, *, precision):
    """Accumulate one split's partial Gram G_c = F_c @ F_c^T over its K tiles."""
    j = pl.program_id(1)

    @pl.when(j == 0)
    def _():
        acc_ref[...] = jnp.zeros_like(acc_ref)

    f = f_ref[...]
    # MXU matmul with f32 accumulation; the (M, M) accumulator stays resident
    # and lane-parallel across K steps (no cross-lane work until the wrapper).
    acc_ref[...] += lax.dot_general(
        f, f, _NT_DIMS, preferred_element_type=jnp.float32, precision=precision)

    @pl.when(j == pl.num_programs(1) - 1)
    def _():
        o_ref[0] = acc_ref[...]


def _pick_tile_k(m, k_padded, itemsize, *, vmem_plan_bytes=_VMEM_PLAN_BYTES):
    """Largest K tile (multiple of 128 dividing k_padded) that fits the VMEM plan.

    Accounts for ALL resident VMEM: the (M, M) f32 accumulator scratch, the
    (conservatively double-buffered) (1, M, M) f32 output block, and the
    double-buffered F input block.  Never returns a tile larger than the
    budget allows (except the minimum 128-lane tile, which is the floor).
    """
    resident = 3 * m * m * 4                      # scratch + 2x output buffers
    per_block_budget = max((vmem_plan_bytes - resident) // 2, 0)  # F is 2x buffered

    best = None
    t = 128
    while t <= k_padded:
        if k_padded % t == 0 and m * t * itemsize <= per_block_budget:
            best = t
        t += 128
    if best is None:
        # TODO(synk): tile the (M, M) Gram output for huge M; 128 is the floor.
        best = 128
    return best


def _gram_pallas(feats, *, tile_k=None):
    """Un-normalized Gram F @ F^T via Pallas, returned as summed f32 (M, M)."""
    m, k = feats.shape
    itemsize = jnp.dtype(feats.dtype).itemsize

    # Pad K to a multiple of 128 with zeros (zeros do not change F @ F^T).
    pad = (-k) % 128
    if pad:
        feats = jnp.pad(feats, ((0, 0), (0, pad)))
    kp = k + pad

    if tile_k is None:
        tile_k = _pick_tile_k(m, kp, itemsize)
    assert kp % tile_k == 0 and tile_k % 128 == 0
    k_tiles = kp // tile_k

    # Split the K-tile range across a leading "parallel" axis: on v7x each
    # TensorCore streams half of F; on v5e/v6e it simply iterates serially.
    num_splits = 2 if (k_tiles >= 2 and k_tiles % 2 == 0) else 1
    tiles_per_split = k_tiles // num_splits

    # Explicit precision: HIGHEST for f32 parity with PyTorch; native for bf16.
    precision = (lax.Precision.HIGHEST
                 if feats.dtype == jnp.float32 else None)
    kernel = functools.partial(_gram_kernel, precision=precision)

    partials = pl.pallas_call(
        kernel,
        out_shape=jax.ShapeDtypeStruct((num_splits, m, m), jnp.float32),
        grid=(num_splits, tiles_per_split),
        in_specs=[
            # Features: tile only the K (contraction) axis; each split owns a
            # contiguous range of K tiles.
            pl.BlockSpec((m, tile_k),
                         lambda c, j: (0, c * tiles_per_split + j)),
        ],
        # One resident partial-Gram block per split (constant over the K axis).
        out_specs=pl.BlockSpec((1, m, m), lambda c, j: (c, 0, 0)),
        scratch_shapes=[pltpu.VMEM((m, m), jnp.float32)],
        compiler_params=pltpu.CompilerParams(
            dimension_semantics=("parallel", "arbitrary"),
            vmem_limit_bytes=_VMEM_LIMIT_BYTES,
        ),
    )(feats)

    return jnp.sum(partials, axis=0)


def gram_matrix_ref(x):
    """Plain-JAX gram_matrix (used for the precomputed .detach()'d target)."""
    a, b, c, d = x.shape
    f = x.reshape(a * b, c * d).astype(jnp.float32)
    g = jnp.dot(f, f.T, precision=lax.Precision.HIGHEST)
    return g / (a * b * c * d)


def style_loss(x, target_gram, *, force_pallas=False, tile_k=None):
    """StyleLoss.forward: returns (input passthrough, mse(gram(x), target_gram))."""
    a, b, c, d = x.shape
    m, k = a * b, c * d
    assert target_gram.shape == (m, m), "target Gram must be (N*C, N*C)"
    target_gram = target_gram.astype(jnp.float32)
    norm = float(a * b * c * d)

    feats = x.reshape(m, k)
    nbytes = m * k * jnp.dtype(feats.dtype).itemsize

    if nbytes < _SMALL_PROBLEM_BYTES and not force_pallas:
        # Small-problem escape hatch: kernel launch/DMA setup would dominate.
        g_raw = jnp.dot(feats.astype(jnp.float32), feats.astype(jnp.float32).T,
                        precision=lax.Precision.HIGHEST)
    else:
        g_raw = _gram_pallas(feats, tile_k=tile_k)

    g = g_raw / norm
    diff = g - target_gram
    loss = jnp.mean(diff * diff)

    # StyleLoss.forward returns the input unchanged (loss is a side value).
    return x, loss


if __name__ == "__main__":
    key = jax.random.PRNGKey(0)
    k1, k2, k3, k4 = jax.random.split(key, 4)

    # Small NCHW feature map consistent with a style-transfer style layer.
    N, C, H, W = 2, 4, 16, 16
    x = jax.random.normal(k1, (N, C, H, W), dtype=jnp.float32)
    target_feature = 2.0 * jax.random.normal(k2, (N, C, H, W), dtype=jnp.float32)
    target_gram = gram_matrix_ref(target_feature)
    ref_loss = jnp.mean((gram_matrix_ref(x) - target_gram) ** 2)

    # 1) Default path (small-problem escape hatch).
    out, loss = style_loss(x, target_gram)
    out, loss = jax.block_until_ready((out, loss))
    assert jnp.allclose(loss, ref_loss, rtol=1e-5, atol=1e-9), (loss, ref_loss)
    assert jnp.array_equal(out, x)

    # 2) Force the Pallas kernel with tile_k=128 so K takes 2 tiles and the
    #    2-way "parallel" split + per-split partial-Gram path is exercised.
    out_p, loss_p = style_loss(x, target_gram, force_pallas=True, tile_k=128)
    out_p, loss_p = jax.block_until_ready((out_p, loss_p))
    assert jnp.allclose(loss_p, ref_loss, rtol=1e-5, atol=1e-9), (loss_p, ref_loss)
    assert jnp.array_equal(out_p, x)

    # 3) A slightly larger shape so each split accumulates over multiple K tiles.
    N2, C2, H2, W2 = 1, 8, 32, 64
    x2 = jax.random.normal(k3, (N2, C2, H2, W2), dtype=jnp.float32)
    tgt2 = gram_matrix_ref(2.0 * jax.random.normal(k4, (N2, C2, H2, W2),
                                                   dtype=jnp.float32))
    out2, loss2 = style_loss(x2, tgt2, force_pallas=True, tile_k=128)
    out2, loss2 = jax.block_until_ready((out2, loss2))
    ref_loss2 = jnp.mean((gram_matrix_ref(x2) - tgt2) ** 2)
    assert jnp.allclose(loss2, ref_loss2, rtol=1e-5, atol=1e-9), (loss2, ref_loss2)
    assert jnp.array_equal(out2, x2)

    print("KERNEL_OK")
</pallas_src>

<mosaic_0001>
module attributes {stable_mosaic.version = 11 : i64} {
  func.func @_gram_kernel(%arg0: i32, %arg1: i32, %arg2: memref<8x128xf32, #tpu.memory_space<vmem>>, %arg3: memref<1x8x8xf32, #tpu.memory_space<vmem>>, %arg4: memref<8x8xf32, #tpu.memory_space<vmem>>) attributes {dimension_semantics = [#tpu.dimension_semantics<parallel>, #tpu.dimension_semantics<arbitrary>], iteration_bounds = array<i64: 2, 1>, scalar_prefetch = 0 : i64, scratch_operands = 1 : i64, tpu.core_type = #tpu.core_type<tc>, window_params = [{transform_indices = @transform_0, window_bounds = array<i64: 8, 128>}, {transform_indices = @transform_1, window_bounds = array<i64: 1, 8, 8>}]} {
    %c0_i32 = arith.constant 0 : i32
    %0 = arith.cmpi eq, %arg1, %c0_i32 : i32
    %1 = arith.extui %0 : i1 to i32
    %c0_i32_0 = arith.constant 0 : i32
    %2 = arith.cmpi ne, %1, %c0_i32_0 : i32
    scf.if %2 {
      %cst_8 = arith.constant 0.000000e+00 : f32
      %11 = vector.broadcast %cst_8 : f32 to vector<8x8xf32>
      %c0_9 = arith.constant 0 : index
      %c0_10 = arith.constant 0 : index
      %12 = vector.load %arg4[%c0_9, %c0_10] : memref<8x8xf32, #tpu.memory_space<vmem>>, vector<8x8xf32>
      tpu.vector_store %arg4[%c0_9, %c0_10], %11 {strides = array<i32>} : memref<8x8xf32, #tpu.memory_space<vmem>>, vector<8x8xf32>,
    } else {
    }
    %c0 = arith.constant 0 : index
    %c0_1 = arith.constant 0 : index
    %3 = vector.load %arg2[%c0, %c0_1] : memref<8x128xf32, #tpu.memory_space<vmem>>, vector<8x128xf32>
    %c0_2 = arith.constant 0 : index
    %c0_3 = arith.constant 0 : index
    %4 = vector.load %arg4[%c0_2, %c0_3] : memref<8x8xf32, #tpu.memory_space<vmem>>, vector<8x8xf32>
    %cst = arith.constant dense<0.000000e+00> : vector<8x8xf32>
    %5 = tpu.matmul %3, %3, %cst {dimension_numbers = #tpu.dot_dimension_numbers<[1], [1], [0], [0], [0, 0, 1, 0], [], []>, precision = #tpu.contract_precision<fp32>} : vector<8x128xf32>, vector<8x128xf32>, vector<8x8xf32> -> vector<8x8xf32>
    %6 = arith.addf %4, %5 : vector<8x8xf32>
    %c0_4 = arith.constant 0 : index
    %c0_5 = arith.constant 0 : index
    %7 = vector.load %arg4[%c0_4, %c0_5] : memref<8x8xf32, #tpu.memory_space<vmem>>, vector<8x8xf32>
    tpu.vector_store %arg4[%c0_4, %c0_5], %6 {strides = array<i32>} : memref<8x8xf32, #tpu.memory_space<vmem>>, vector<8x8xf32>,
    %c0_i32_6 = arith.constant 0 : i32
    %8 = arith.cmpi eq, %arg1, %c0_i32_6 : i32
    %9 = arith.extui %8 : i1 to i32
    %c0_i32_7 = arith.constant 0 : i32
    %10 = arith.cmpi ne, %9, %c0_i32_7 : i32
    scf.if %10 {
      %c0_8 = arith.constant 0 : index
      %c0_9 = arith.constant 0 : index
      %11 = vector.load %arg4[%c0_8, %c0_9] : memref<8x8xf32, #tpu.memory_space<vmem>>, vector<8x8xf32>
      %c0_10 = arith.constant 0 : index
      %c0_11 = arith.constant 0 : index
      %c0_12 = arith.constant 0 : index
      %12 = vector.load %arg3[%c0_10, %c0_11, %c0_12] : memref<1x8x8xf32, #tpu.memory_space<vmem>>, vector<1x8x8xf32>
      %13 = vector.shape_cast %12 : vector<1x8x8xf32> to vector<8x8xf32>
      %14 = vector.shape_cast %11 : vector<8x8xf32> to vector<1x8x8xf32>
      tpu.vector_store %arg3[%c0_10, %c0_11, %c0_12], %14 {strides = array<i32>} : memref<1x8x8xf32, #tpu.memory_space<vmem>>, vector<1x8x8xf32>,
    } else {
    }
    return
  }
  func.func @transform_0(%arg0: i32, %arg1: i32) -> (i32, i32) {
    %c1_i32 = arith.constant 1 : i32
    %0 = arith.muli %arg0, %c1_i32 : i32
    %1 = arith.addi %0, %arg1 : i32
    %c0_i32 = arith.constant 0 : i32
    %c0_i32_0 = arith.constant 0 : i32
    return %c0_i32, %1 : i32, i32
  }
  func.func @transform_1(%arg0: i32, %arg1: i32) -> (i32, i32, i32) {
    %c0_i32 = arith.constant 0 : i32
    %c0_i32_0 = arith.constant 0 : i32
    %c0_i32_1 = arith.constant 0 : i32
    return %arg0, %c0_i32, %c0_i32_0 : i32, i32, i32
  }
}

</mosaic_0001>

<llo_original>
// kernel: tpu_custom_call.1
$region0: #{tpu_custom_call.1}
  #allocation0 [shape = 'u32[]', space=smem, size = 0x4, offset = 0x4, fixed_abs, tag = 'smem constant byte address 0x4 - core index']
  #allocation1 [shape = 'u32[144,128]{1,0:T(1,128)}', space=vmem, size = 0x12000, scoped, tag = 'internal scratch']
  #allocation2 [shape = 'f32[8,8]{1,0:T(8,128)}', space=vmem, size = 0x1000, scoped, tag = 'scratch operand']
  %s0 = inlined_call_operand.hbm [shape: f32[8,256], index: 0, kind: input, shape index: {}]
  %s1 = inlined_call_operand.hbm [shape: f32[2,8,8], index: 1, kind: output, shape index: {}]
  %s2 = sld [smem:[#allocation0]]
  $region49: #{tpu_custom_call.1} parent=0
    _
  %s4 = ssub.s32 1, %s2
  %s5 = scalar_select 0, %s4, %s2
  $region1: #{tpu_custom_call.1} parent=0
    #allocation3 [shape = 'u8[8192]{0}', space=vmem, size = 0x2000, scoped, tag = 'input window, operand 0']
    #allocation4 [shape = 's32[2]{0}', space=sflag, size = 0x8, scoped, tag = 'scoped memory for tpu_custom_call.1']
    #allocation5 [shape = 's32[2]{0}', space=sflag, size = 0x8, scoped, tag = 'scoped memory for tpu_custom_call.1']
    #allocation6 [shape = 'u8[8192]{0}', space=vmem, size = 0x2000, scoped, tag = 'output window, operand 0']
    %6 = vsyncpa [#allocation4], 0
    %s7 = scalar_lea.sflag [#allocation4], 1
    %8 = vsyncpa %s7, 0
    %9 = vsyncpa [#allocation5], 0
    %s10 = scalar_lea.sflag [#allocation5], 1
    %11 = vsyncpa %s10, 0
    loop: start=0, step=1, limit=4
    $region2: #{tpu_custom_call.1} parent=1 // loop_pre_header
      _
    $region3: #{tpu_custom_call.1} parent=1 // loop_header
      %s13 = sphi 0, %s17
      %p14 = scmp.ge.s32.totalorder %s13, 4
      %s20 = sphi 0, %s32
      %s21 = sphi 0, %s28
      %s22 = sphi 0, %s20
      %s23 = sphi 0, %s21
      %s24 = sphi 0, %s22
      %s25 = sphi 0, %s23
      %s37 = sphi 0, %s39
      %s40 = sphi 0, %s37
      %s41 = sphi 0, %s40
      %s57 = sphi 0, %s41
      %s63 = sphi 0, %s65
      %s66 = sphi 0, %s63
      %s67 = sphi 0, %s66
      %s83 = sphi 0, %s67
    $region4: #{tpu_custom_call.1} parent=1 // loop_header_branch
      %16 = sbr.rel (%p14) target = $region8
    $region5: #{tpu_custom_call.1} parent=1 // loop_body
      %s18 = ssub.s32 %s13, 1
      %s19 = ssub.s32 %s13, 2
      %s26 = sadd.s32 1, %s21
      %p27 = scmp.ge.s32.totalorder %s26, 1
      %s28 = scalar_select %p27, 0, %s26
      %s29 = sadd.s32 1, %s20
      %s30 = scalar_select %p27, %s29, %s20
      %p31 = scmp.ge.s32.totalorder %s30, 2
      %s32 = scalar_select %p31, 0, %s30
      %s33 = sadd.s32 %s20, %s21
      %s34 = sadd.s32 %s32, %s28
      %s35 = ssub.s32 %s33, %s34
      %p36 = scmp.eq.s32.totalorder %s35, 0
      %s38 = sadd.s32 %s37, 1
      %s39 = scalar_select %p36, %s37, %s38
      %p42 = pneg %p36
      %p43 = scmp.eq.s32.totalorder %s13, 1
      %p44 = por %p42, %p43
      %p45 = scmp.ne.s32.totalorder %s37, %s40
      %p46 = scmp.eq.s32.totalorder %s13, 0
      %p47 = por %p45, %p46
      %p48 = scmp.ne.s32.totalorder %s37, %s40
      %p49 = scmp.eq.s32.totalorder %s18, 1
      %p50 = por %p48, %p49
      %p51 = scmp.ne.s32.totalorder %s40, %s41
      %p52 = scmp.eq.s32.totalorder %s18, 0
      %p53 = por %p51, %p52
      %p54 = scmp.ne.s32.totalorder %s40, %s41
      %p55 = scmp.eq.s32.totalorder %s19, 1
      %p56 = por %p54, %p55
      %p58 = scmp.ne.s32.totalorder %s41, %s57
      %p59 = scmp.eq.s32.totalorder %s19, 0
      %p60 = por %p58, %p59
      %s61 = ssub.s32 %s20, %s32
      %p62 = scmp.eq.s32.totalorder %s61, 0
      %s64 = sadd.s32 %s63, 1
      %s65 = scalar_select %p62, %s63, %s64
      %p68 = pneg %p62
      %p69 = scmp.eq.s32.totalorder %s13, 1
      %p70 = por %p68, %p69
      %p71 = scmp.ne.s32.totalorder %s63, %s66
      %p72 = scmp.eq.s32.totalorder %s13, 0
      %p73 = por %p71, %p72
      %p74 = scmp.ne.s32.totalorder %s63, %s66
      %p75 = scmp.eq.s32.totalorder %s18, 1
      %p76 = por %p74, %p75
      %p77 = scmp.ne.s32.totalorder %s66, %s67
      %p78 = scmp.eq.s32.totalorder %s18, 0
      %p79 = por %p77, %p78
      %p80 = scmp.ne.s32.totalorder %s66, %s67
      %p81 = scmp.eq.s32.totalorder %s19, 1
      %p82 = por %p80, %p81
      %p84 = scmp.ne.s32.totalorder %s67, %s83
      %p85 = scmp.eq.s32.totalorder %s19, 0
      %p86 = por %p84, %p85
      %p87 = scmp.le.s32.totalorder 1, %s13
      %p88 = scmp.lt.s32.totalorder %s13, 3
      %p89 = pnand %p87, %p88
      %p90 = pneg %p89
      // Predicated region
      $region9: #{tpu_custom_call.1} parent=5 // pred_check
        _
      $region10: #{tpu_custom_call.1} parent=5 // pred_check_branch
        %92 = sbr.rel (%p89) target = $region12
      $region11: #{tpu_custom_call.1} parent=5 // pred_region
        %s93 = ssub.s32 %s13, 1
      $region12: #{tpu_custom_call.1} parent=5 // pred_fallthru
        _
      %p94 = scmp.lt.s32.totalorder %s13, 2
      // Predicated region
      $region13: #{tpu_custom_call.1} parent=5 // pred_check
        %p95 = pneg %p94
      $region14: #{tpu_custom_call.1} parent=5 // pred_check_branch
        %97 = sbr.rel (%p95) target = $region16
      $region15: #{tpu_custom_call.1} parent=5 // pred_region
        // Predicated region
        $region17: #{tpu_custom_call.1} parent=15 // pred_check
          %p98 = pneg %p47
        $region18: #{tpu_custom_call.1} parent=15 // pred_check_branch
          %100 = sbr.rel (%p98) target = $region20
        $region19: #{tpu_custom_call.1} parent=15 // pred_region
          %s101 = sand.u32 %s37, 1
          %s102 = scalar_lea.sflag [#allocation4], %s101
          %s103 = sand.u32 %s37, 1
          %s104 = smul.addr %s103, 8
          %s105 = scalar_lea.vmem [#allocation3], %s104
          %s106 = sadd.s32 %s20, %s21
          %s108 = ssub.s32 128, 128
          %109 = vsyncadd %s102, %s108
          %s110 = smul.addr %s106, 128
          %s111 = scalar_lea.hbm %s0, %s110
          %s113 = sshll.u32 %s105, 4
          %s114 = int_to_ptr.vmem [resolvable:$true] %s113
          %116 = dma.hbm_to_vmem [thread:$0]  %s111, 128, %s114, %s102
        $region20: #{tpu_custom_call.1} parent=15 // pred_fallthru
          _
      $region16: #{tpu_custom_call.1} parent=5 // pred_fallthru
        _
      %p117 = scmp.le.s32.totalorder 1, %s13
      %p118 = scmp.lt.s32.totalorder %s13, 3
      %p119 = pnand %p117, %p118
      %p120 = pneg %p119
      // Predicated region
      $region21: #{tpu_custom_call.1} parent=5 // pred_check
        _
      $region22: #{tpu_custom_call.1} parent=5 // pred_check_branch
        %122 = sbr.rel (%p119) target = $region24
      $region23: #{tpu_custom_call.1} parent=5 // pred_region
        %s123 = ssub.s32 %s13, 1
        %s124 = sand.u32 %s40, 1
        %s125 = scalar_lea.sflag [#allocation4], %s124
        %s126 = sand.u32 %s40, 1
        %s127 = smul.addr %s126, 8
        %s128 = scalar_lea.vmem [#allocation3], %s127
        // Predicated region
        $region25: #{tpu_custom_call.1} parent=23 // pred_check
          %p129 = pneg %p53
        $region26: #{tpu_custom_call.1} parent=23 // pred_check_branch
          %131 = sbr.rel (%p129) target = $region28
        $region27: #{tpu_custom_call.1} parent=23 // pred_region
          %132 = dma.done %s125, 128
        $region28: #{tpu_custom_call.1} parent=23 // pred_fallthru
          _
        %s133 = sand.u32 %s40, 1
        %s134 = scalar_lea.sflag [#allocation4], %s133
        %s135 = sand.u32 %s40, 1
        %s136 = smul.addr %s135, 8
        %s137 = scalar_lea.vmem [#allocation3], %s136
        %p138 = pneg %p53
        %p139 = pneg %p50
        %p140 = pneg %p79
        %p141 = pneg %p76
        %s142 = sand.u32 %s66, 1
        %s143 = scalar_lea.sflag [#allocation5], %s142
        %s144 = sand.u32 %s66, 1
        %s145 = smul.addr %s144, 8
        %s146 = scalar_lea.vmem [#allocation6], %s145
        %s147 = sadd.s32 %s22, %s23
        %p148 = scmp.eq.s32.totalorder %s23, 0
        // Predicated region
        $region29: #{tpu_custom_call.1} parent=23 // pred_check
          %p149 = pneg %p148
        $region30: #{tpu_custom_call.1} parent=23 // pred_check_branch
          %151 = sbr.rel (%p149) target = $region32
        $region31: #{tpu_custom_call.1} parent=23 // pred_region
          %vm152 = vcmask 64512
          %153 = vst.msk [vmem:[#allocation2] sm:$0xff] %vm152, 0.0
        $region32: #{tpu_custom_call.1} parent=23 // pred_fallthru
          _
        %v154 = vld [vmem:[%s128] sm:$0xff]
        %v155 = vld [vmem:[#allocation2] sm:$0xff]
        %156 = vmatprep.subr.mxu0 0.0
        %v157 = vand.u32 %v154, 4294901760
        %158 = vmatpush1.xpose.msra.mxu0 %v157
        %159 = vmatprep.subr.mxu0 0.0
        %160 = vmatpush1.xpose.msra.mxu0 0.0
        %161 = vmatprep.subr.mxu0 0.0
        %162 = vmatpush1.xpose.msra.mxu0 0.0
        %163 = vmatprep.subr.mxu0 0.0
        %164 = vmatpush1.xpose.msra.mxu0 0.0
        %165 = vmatprep.subr.mxu0 0.0
        %166 = vmatpush1.xpose.msra.mxu0 0.0
        %167 = vmatprep.subr.mxu0 0.0
        %168 = vmatpush1.xpose.msra.mxu0 0.0
        %169 = vmatprep.subr.mxu0 0.0
        %170 = vmatpush1.xpose.msra.mxu0 0.0
        %171 = vmatprep.subr.mxu0 0.0
        %172 = vmatpush1.xpose.msra.mxu0 0.0
        %173 = vmatprep.subr.mxu0 0.0
        %174 = vmatpush1.xpose.msra.mxu0 0.0
        %175 = vmatprep.subr.mxu0 0.0
        %176 = vmatpush1.xpose.msra.mxu0 0.0
        %177 = vmatprep.subr.mxu0 0.0
        %178 = vmatpush1.xpose.msra.mxu0 0.0
        %179 = vmatprep.subr.mxu0 0.0
        %180 = vmatpush1.xpose.msra.mxu0 0.0
        %181 = vmatprep.subr.mxu0 0.0
        %182 = vmatpush1.xpose.msra.mxu0 0.0
        %183 = vmatprep.subr.mxu0 0.0
        %184 = vmatpush1.xpose.msra.mxu0 0.0
        %185 = vmatprep.subr.mxu0 0.0
        %186 = vmatpush1.xpose.msra.mxu0 0.0
        %187 = vmatprep.subr.mxu0 0.0
        %188 = vmatpush1.xpose.msra.mxu0 0.0
        %189 = vmatprep.subr.mxu0 0.0
        %190 = vmatpush1.xpose.msra.mxu0 0.0
        %191 = vmatprep.subr.mxu0 0.0
        %192 = vmatpush1.xpose.msra.mxu0 0.0
        %193 = vmatprep.subr.mxu0 0.0
        %194 = vmatpush1.xpose.msra.mxu0 0.0
        %195 = vmatprep.subr.mxu0 0.0
        %196 = vmatpush1.xpose.msra.mxu0 0.0
        %197 = vmatprep.subr.mxu0 0.0
        %198 = vmatpush1.xpose.msra.mxu0 0.0
        %199 = vmatprep.subr.mxu0 0.0
        %200 = vmatpush1.xpose.msra.mxu0 0.0
        %201 = vmatprep.subr.mxu0 0.0
        %202 = vmatpush1.xpose.msra.mxu0 0.0
        %203 = vmatprep.subr.mxu0 0.0
        %204 = vmatpush1.xpose.msra.mxu0 0.0
        %205 = vmatprep.subr.mxu0 0.0
        %206 = vmatpush1.xpose.msra.mxu0 0.0
        %207 = vmatprep.subr.mxu0 0.0
        %208 = vmatpush1.xpose.msra.mxu0 0.0
        %209 = vmatprep.subr.mxu0 0.0
        %210 = vmatpush1.xpose.msra.mxu0 0.0
        %211 = vmatprep.subr.mxu0 0.0
        %212 = vmatpush1.xpose.msra.mxu0 0.0
        %213 = vmatprep.subr.mxu0 0.0
        %214 = vmatpush1.xpose.msra.mxu0 0.0
        %215 = vmatprep.subr.mxu0 0.0
        %216 = vmatpush1.xpose.msra.mxu0 0.0
        %217 = vmatprep.subr.mxu0 0.0
        %218 = vmatpush1.xpose.msra.mxu0 0.0
        %219 = vmatprep.subr.mxu0 0.0
        %220 = vmatpush1.xpose.msra.mxu0 0.0
        %221 = vmatprep.mubr.f32.mxu0 0.0
        %v222 = vand.u32 %v154, 4294901760
        %v223 = vsub.f32 %v154, %v222
        %v224 = vand.u32 %v223, 4294901760
        %v225 = vsub.f32 %v223, %v224
        %v226 = vand.u32 %v225, 4294901760
        %227 = vmatmul.mubr.f32.gmra.mrb[0].mxu0 %v226
        %v228 = vpop.f32.mrb[0].mxu0
        %v229 = vadd.f32 0.0, %v228
        %v230 = vpop.f32.mrb[0].mxu0
        %231 = vdwg.mxu0
        %232 = vmatprep.subr.mxu0 0.0
        %v233 = vand.u32 %v154, 4294901760
        %v234 = vsub.f32 %v154, %v233
        %v235 = vand.u32 %v234, 4294901760
        %v236 = vsub.f32 %v234, %v235
        %v237 = vand.u32 %v236, 4294901760
        %238 = vmatpush1.xpose.msra.mxu0 %v237
        %239 = vmatprep.subr.mxu0 0.0
        %240 = vmatpush1.xpose.msra.mxu0 0.0
        %241 = vmatprep.subr.mxu0 0.0
        %242 = vmatpush1.xpose.msra.mxu0 0.0
        %243 = vmatprep.subr.mxu0 0.0
        %244 = vmatpush1.xpose.msra.mxu0 0.0
        %245 = vmatprep.subr.mxu0 0.0
        %246 = vmatpush1.xpose.msra.mxu0 0.0
        %247 = vmatprep.subr.mxu0 0.0
        %248 = vmatpush1.xpose.msra.mxu0 0.0
        %249 = vmatprep.subr.mxu0 0.0
        %250 = vmatpush1.xpose.msra.mxu0 0.0
        %251 = vmatprep.subr.mxu0 0.0
        %252 = vmatpush1.xpose.msra.mxu0 0.0
        %253 = vmatprep.subr.mxu0 0.0
        %254 = vmatpush1.xpose.msra.mxu0 0.0
        %255 = vmatprep.subr.mxu0 0.0
        %256 = vmatpush1.xpose.msra.mxu0 0.0
        %257 = vmatprep.subr.mxu0 0.0
        %258 = vmatpush1.xpose.msra.mxu0 0.0
        %259 = vmatprep.subr.mxu0 0.0
        %260 = vmatpush1.xpose.msra.mxu0 0.0
        %261 = vmatprep.subr.mxu0 0.0
        %262 = vmatpush1.xpose.msra.mxu0 0.0
        %263 = vmatprep.subr.mxu0 0.0
        %264 = vmatpush1.xpose.msra.mxu0 0.0
        %265 = vmatprep.subr.mxu0 0.0
        %266 = vmatpush1.xpose.msra.mxu0 0.0
        %267 = vmatprep.subr.mxu0 0.0
        %268 = vmatpush1.xpose.msra.mxu0 0.0
        %269 = vmatprep.subr.mxu0 0.0
        %270 = vmatpush1.xpose.msra.mxu0 0.0
        %271 = vmatprep.subr.mxu0 0.0
        %272 = vmatpush1.xpose.msra.mxu0 0.0
        %273 = vmatprep.subr.mxu0 0.0
        %274 = vmatpush1.xpose.msra.mxu0 0.0
        %275 = vmatprep.subr.mxu0 0.0
        %276 = vmatpush1.xpose.msra.mxu0 0.0
        %277 = vmatprep.subr.mxu0 0.0
        %278 = vmatpush1.xpose.msra.mxu0 0.0
        %279 = vmatprep.subr.mxu0 0.0
        %280 = vmatpush1.xpose.msra.mxu0 0.0
        %281 = vmatprep.subr.mxu0 0.0
        %282 = vmatpush1.xpose.msra.mxu0 0.0
        %283 = vmatprep.subr.mxu0 0.0
        %284 = vmatpush1.xpose.msra.mxu0 0.0
        %285 = vmatprep.subr.mxu0 0.0
        %286 = vmatpush1.xpose.msra.mxu0 0.0
        %287 = vmatprep.subr.mxu0 0.0
        %288 = vmatpush1.xpose.msra.mxu0 0.0
        %289 = vmatprep.subr.mxu0 0.0
        %290 = vmatpush1.xpose.msra.mxu0 0.0
        %291 = vmatprep.subr.mxu0 0.0
        %292 = vmatpush1.xpose.msra.mxu0 0.0
        %293 = vmatprep.subr.mxu0 0.0
        %294 = vmatpush1.xpose.msra.mxu0 0.0
        %295 = vmatprep.subr.mxu0 0.0
        %296 = vmatpush1.xpose.msra.mxu0 0.0
        %297 = vmatprep.subr.mxu0 0.0
        %298 = vmatpush1.xpose.msra.mxu0 0.0
        %299 = vmatprep.subr.mxu0 0.0
        %300 = vmatpush1.xpose.msra.mxu0 0.0
        %301 = vmatprep.mubr.f32.mxu0 0.0
        %v302 = vand.u32 %v154, 4294901760
        %303 = vmatmul.mubr.f32.gmra.mrb[0].mxu0 %v302
        %v304 = vpop.f32.mrb[0].mxu0
        %v305 = vadd.f32 %v229, %v304
        %v306 = vpop.f32.mrb[0].mxu0
        %307 = vdwg.mxu0
        %308 = vmatprep.subr.mxu0 0.0
        %v309 = vand.u32 %v154, 4294901760
        %v310 = vsub.f32 %v154, %v309
        %311 = vmatpush1.xpose.msra.mxu0 %v310
        %312 = vmatprep.subr.mxu0 0.0
        %313 = vmatpush1.xpose.msra.mxu0 0.0
        %314 = vmatprep.subr.mxu0 0.0
        %315 = vmatpush1.xpose.msra.mxu0 0.0
        %316 = vmatprep.subr.mxu0 0.0
        %317 = vmatpush1.xpose.msra.mxu0 0.0
        %318 = vmatprep.subr.mxu0 0.0
        %319 = vmatpush1.xpose.msra.mxu0 0.0
        %320 = vmatprep.subr.mxu0 0.0
        %321 = vmatpush1.xpose.msra.mxu0 0.0
        %322 = vmatprep.subr.mxu0 0.0
        %323 = vmatpush1.xpose.msra.mxu0 0.0
        %324 = vmatprep.subr.mxu0 0.0
        %325 = vmatpush1.xpose.msra.mxu0 0.0
        %326 = vmatprep.subr.mxu0 0.0
        %327 = vmatpush1.xpose.msra.mxu0 0.0
        %328 = vmatprep.subr.mxu0 0.0
        %329 = vmatpush1.xpose.msra.mxu0 0.0
        %330 = vmatprep.subr.mxu0 0.0
        %331 = vmatpush1.xpose.msra.mxu0 0.0
        %332 = vmatprep.subr.mxu0 0.0
        %333 = vmatpush1.xpose.msra.mxu0 0.0
        %334 = vmatprep.subr.mxu0 0.0
        %335 = vmatpush1.xpose.msra.mxu0 0.0
        %336 = vmatprep.subr.mxu0 0.0
        %337 = vmatpush1.xpose.msra.mxu0 0.0
        %338 = vmatprep.subr.mxu0 0.0
        %339 = vmatpush1.xpose.msra.mxu0 0.0
        %340 = vmatprep.subr.mxu0 0.0
        %341 = vmatpush1.xpose.msra.mxu0 0.0
        %342 = vmatprep.subr.mxu0 0.0
        %343 = vmatpush1.xpose.msra.mxu0 0.0
        %344 = vmatprep.subr.mxu0 0.0
        %345 = vmatpush1.xpose.msra.mxu0 0.0
        %346 = vmatprep.subr.mxu0 0.0
        %347 = vmatpush1.xpose.msra.mxu0 0.0
        %348 = vmatprep.subr.mxu0 0.0
        %349 = vmatpush1.xpose.msra.mxu0 0.0
        %350 = vmatprep.subr.mxu0 0.0
        %351 = vmatpush1.xpose.msra.mxu0 0.0
        %352 = vmatprep.subr.mxu0 0.0
        %353 = vmatpush1.xpose.msra.mxu0 0.0
        %354 = vmatprep.subr.mxu0 0.0
        %355 = vmatpush1.xpose.msra.mxu0 0.0
        %356 = vmatprep.subr.mxu0 0.0
        %357 = vmatpush1.xpose.msra.mxu0 0.0
        %358 = vmatprep.subr.mxu0 0.0
        %359 = vmatpush1.xpose.msra.mxu0 0.0
        %360 = vmatprep.subr.mxu0 0.0
        %361 = vmatpush1.xpose.msra.mxu0 0.0
        %362 = vmatprep.subr.mxu0 0.0
        %363 = vmatpush1.xpose.msra.mxu0 0.0
        %364 = vmatprep.subr.mxu0 0.0
        %365 = vmatpush1.xpose.msra.mxu0 0.0
        %366 = vmatprep.subr.mxu0 0.0
        %367 = vmatpush1.xpose.msra.mxu0 0.0
        %368 = vmatprep.subr.mxu0 0.0
        %369 = vmatpush1.xpose.msra.mxu0 0.0
        %370 = vmatprep.subr.mxu0 0.0
        %371 = vmatpush1.xpose.msra.mxu0 0.0
        %372 = vmatprep.subr.mxu0 0.0
        %373 = vmatpush1.xpose.msra.mxu0 0.0
        %374 = vmatprep.mubr.f32.mxu0 0.0
        %v375 = vand.u32 %v154, 4294901760
        %v376 = vsub.f32 %v154, %v375
        %377 = vmatmul.mubr.f32.gmra.mrb[0].mxu0 %v376
        %v378 = vpop.f32.mrb[0].mxu0
        %v379 = vadd.f32 %v305, %v378
        %v380 = vpop.f32.mrb[0].mxu0
        %381 = vdwg.mxu0
        %382 = vmatprep.subr.mxu0 0.0
        %v383 = vand.u32 %v154, 4294901760
        %384 = vmatpush1.xpose.msra.mxu0 %v383
        %385 = vmatprep.subr.mxu0 0.0
        %386 = vmatpush1.xpose.msra.mxu0 0.0
        %387 = vmatprep.subr.mxu0 0.0
        %388 = vmatpush1.xpose.msra.mxu0 0.0
        %389 = vmatprep.subr.mxu0 0.0
        %390 = vmatpush1.xpose.msra.mxu0 0.0
        %391 = vmatprep.subr.mxu0 0.0
        %392 = vmatpush1.xpose.msra.mxu0 0.0
        %393 = vmatprep.subr.mxu0 0.0
        %394 = vmatpush1.xpose.msra.mxu0 0.0
        %395 = vmatprep.subr.mxu0 0.0
        %396 = vmatpush1.xpose.msra.mxu0 0.0
        %397 = vmatprep.subr.mxu0 0.0
        %398 = vmatpush1.xpose.msra.mxu0 0.0
        %399 = vmatprep.subr.mxu0 0.0
        %400 = vmatpush1.xpose.msra.mxu0 0.0
        %401 = vmatprep.subr.mxu0 0.0
        %402 = vmatpush1.xpose.msra.mxu0 0.0
        %403 = vmatprep.subr.mxu0 0.0
        %404 = vmatpush1.xpose.msra.mxu0 0.0
        %405 = vmatprep.subr.mxu0 0.0
        %406 = vmatpush1.xpose.msra.mxu0 0.0
        %407 = vmatprep.subr.mxu0 0.0
        %408 = vmatpush1.xpose.msra.mxu0 0.0
        %409 = vmatprep.subr.mxu0 0.0
        %410 = vmatpush1.xpose.msra.mxu0 0.0
        %411 = vmatprep.subr.mxu0 0.0
        %412 = vmatpush1.xpose.msra.mxu0 0.0
        %413 = vmatprep.subr.mxu0 0.0
        %414 = vmatpush1.xpose.msra.mxu0 0.0
        %415 = vmatprep.subr.mxu0 0.0
        %416 = vmatpush1.xpose.msra.mxu0 0.0
        %417 = vmatprep.subr.mxu0 0.0
        %418 = vmatpush1.xpose.msra.mxu0 0.0
        %419 = vmatprep.subr.mxu0 0.0
        %420 = vmatpush1.xpose.msra.mxu0 0.0
        %421 = vmatprep.subr.mxu0 0.0
        %422 = vmatpush1.xpose.msra.mxu0 0.0
        %423 = vmatprep.subr.mxu0 0.0
        %424 = vmatpush1.xpose.msra.mxu0 0.0
        %425 = vmatprep.subr.mxu0 0.0
        %426 = vmatpush1.xpose.msra.mxu0 0.0
        %427 = vmatprep.subr.mxu0 0.0
        %428 = vmatpush1.xpose.msra.mxu0 0.0
        %429 = vmatprep.subr.mxu0 0.0
        %430 = vmatpush1.xpose.msra.mxu0 0.0
        %431 = vmatprep.subr.mxu0 0.0
        %432 = vmatpush1.xpose.msra.mxu0 0.0
        %433 = vmatprep.subr.mxu0 0.0
        %434 = vmatpush1.xpose.msra.mxu0 0.0
        %435 = vmatprep.subr.mxu0 0.0
        %436 = vmatpush1.xpose.msra.mxu0 0.0
        %437 = vmatprep.subr.mxu0 0.0
        %438 = vmatpush1.xpose.msra.mxu0 0.0
        %439 = vmatprep.subr.mxu0 0.0
        %440 = vmatpush1.xpose.msra.mxu0 0.0
        %441 = vmatprep.subr.mxu0 0.0
        %442 = vmatpush1.xpose.msra.mxu0 0.0
        %443 = vmatprep.subr.mxu0 0.0
        %444 = vmatpush1.xpose.msra.mxu0 0.0
        %445 = vmatprep.subr.mxu0 0.0
        %446 = vmatpush1.xpose.msra.mxu0 0.0
        %447 = vmatprep.mubr.f32.mxu0 0.0
        %v448 = vand.u32 %v154, 4294901760
        %v449 = vsub.f32 %v154, %v448
        %v450 = vand.u32 %v449, 4294901760
        %451 = vmatmul.mubr.f32.gmra.mrb[0].mxu0 %v450
        %v452 = vpop.f32.mrb[0].mxu0
        %v453 = vadd.f32 %v379, %v452
        %v454 = vpop.f32.mrb[0].mxu0
        %455 = vdwg.mxu0
        %456 = vmatprep.subr.mxu0 0.0
        %v457 = vand.u32 %v154, 4294901760
        %v458 = vsub.f32 %v154, %v457
        %v459 = vand.u32 %v458, 4294901760
        %460 = vmatpush1.xpose.msra.mxu0 %v459
        %461 = vmatprep.subr.mxu0 0.0
        %462 = vmatpush1.xpose.msra.mxu0 0.0
        %463 = vmatprep.subr.mxu0 0.0
        %464 = vmatpush1.xpose.msra.mxu0 0.0
        %465 = vmatprep.subr.mxu0 0.0
        %466 = vmatpush1.xpose.msra.mxu0 0.0
        %467 = vmatprep.subr.mxu0 0.0
        %468 = vmatpush1.xpose.msra.mxu0 0.0
        %469 = vmatprep.subr.mxu0 0.0
        %470 = vmatpush1.xpose.msra.mxu0 0.0
        %471 = vmatprep.subr.mxu0 0.0
        %472 = vmatpush1.xpose.msra.mxu0 0.0
        %473 = vmatprep.subr.mxu0 0.0
        %474 = vmatpush1.xpose.msra.mxu0 0.0
        %475 = vmatprep.subr.mxu0 0.0
        %476 = vmatpush1.xpose.msra.mxu0 0.0
        %477 = vmatprep.subr.mxu0 0.0
        %478 = vmatpush1.xpose.msra.mxu0 0.0
        %479 = vmatprep.subr.mxu0 0.0
        %480 = vmatpush1.xpose.msra.mxu0 0.0
        %481 = vmatprep.subr.mxu0 0.0
        %482 = vmatpush1.xpose.msra.mxu0 0.0
        %483 = vmatprep.subr.mxu0 0.0
        %484 = vmatpush1.xpose.msra.mxu0 0.0
        %485 = vmatprep.subr.mxu0 0.0
        %486 = vmatpush1.xpose.msra.mxu0 0.0
        %487 = vmatprep.subr.mxu0 0.0
        %488 = vmatpush1.xpose.msra.mxu0 0.0
        %489 = vmatprep.subr.mxu0 0.0
        %490 = vmatpush1.xpose.msra.mxu0 0.0
        %491 = vmatprep.subr.mxu0 0.0
        %492 = vmatpush1.xpose.msra.mxu0 0.0
        %493 = vmatprep.subr.mxu0 0.0
        %494 = vmatpush1.xpose.msra.mxu0 0.0
        %495 = vmatprep.subr.mxu0 0.0
        %496 = vmatpush1.xpose.msra.mxu0 0.0
        %497 = vmatprep.subr.mxu0 0.0
        %498 = vmatpush1.xpose.msra.mxu0 0.0
        %499 = vmatprep.subr.mxu0 0.0
        %500 = vmatpush1.xpose.msra.mxu0 0.0
        %501 = vmatprep.subr.mxu0 0.0
        %502 = vmatpush1.xpose.msra.mxu0 0.0
        %503 = vmatprep.subr.mxu0 0.0
        %504 = vmatpush1.xpose.msra.mxu0 0.0
        %505 = vmatprep.subr.mxu0 0.0
        %506 = vmatpush1.xpose.msra.mxu0 0.0
        %507 = vmatprep.subr.mxu0 0.0
        %508 = vmatpush1.xpose.msra.mxu0 0.0
        %509 = vmatprep.subr.mxu0 0.0
        %510 = vmatpush1.xpose.msra.mxu0 0.0
        %511 = vmatprep.subr.mxu0 0.0
        %512 = vmatpush1.xpose.msra.mxu0 0.0
        %513 = vmatprep.subr.mxu0 0.0
        %514 = vmatpush1.xpose.msra.mxu0 0.0
        %515 = vmatprep.subr.mxu0 0.0
        %516 = vmatpush1.xpose.msra.mxu0 0.0
        %517 = vmatprep.subr.mxu0 0.0
        %518 = vmatpush1.xpose.msra.mxu0 0.0
        %519 = vmatprep.subr.mxu0 0.0
        %520 = vmatpush1.xpose.msra.mxu0 0.0
        %521 = vmatprep.subr.mxu0 0.0
        %522 = vmatpush1.xpose.msra.mxu0 0.0
        %523 = vmatprep.mubr.f32.mxu0 0.0
        %v524 = vand.u32 %v154, 4294901760
        %525 = vmatmul.mubr.f32.gmra.mrb[0].mxu0 %v524
        %v526 = vpop.f32.mrb[0].mxu0
        %v527 = vadd.f32 %v453, %v526
        %v528 = vpop.f32.mrb[0].mxu0
        %529 = vdwg.mxu0
        %530 = vmatprep.subr.mxu0 0.0
        %v531 = vand.u32 %v154, 4294901760
        %532 = vmatpush1.xpose.msra.mxu0 %v531
        %533 = vmatprep.subr.mxu0 0.0
        %534 = vmatpush1.xpose.msra.mxu0 0.0
        %535 = vmatprep.subr.mxu0 0.0
        %536 = vmatpush1.xpose.msra.mxu0 0.0
        %537 = vmatprep.subr.mxu0 0.0
        %538 = vmatpush1.xpose.msra.mxu0 0.0
        %539 = vmatprep.subr.mxu0 0.0
        %540 = vmatpush1.xpose.msra.mxu0 0.0
        %541 = vmatprep.subr.mxu0 0.0
        %542 = vmatpush1.xpose.msra.mxu0 0.0
        %543 = vmatprep.subr.mxu0 0.0
        %544 = vmatpush1.xpose.msra.mxu0 0.0
        %545 = vmatprep.subr.mxu0 0.0
        %546 = vmatpush1.xpose.msra.mxu0 0.0
        %547 = vmatprep.subr.mxu0 0.0
        %548 = vmatpush1.xpose.msra.mxu0 0.0
        %549 = vmatprep.subr.mxu0 0.0
        %550 = vmatpush1.xpose.msra.mxu0 0.0
        %551 = vmatprep.subr.mxu0 0.0
        %552 = vmatpush1.xpose.msra.mxu0 0.0
        %553 = vmatprep.subr.mxu0 0.0
        %554 = vmatpush1.xpose.msra.mxu0 0.0
        %555 = vmatprep.subr.mxu0 0.0
        %556 = vmatpush1.xpose.msra.mxu0 0.0
        %557 = vmatprep.subr.mxu0 0.0
        %558 = vmatpush1.xpose.msra.mxu0 0.0
        %559 = vmatprep.subr.mxu0 0.0
        %560 = vmatpush1.xpose.msra.mxu0 0.0
        %561 = vmatprep.subr.mxu0 0.0
        %562 = vmatpush1.xpose.msra.mxu0 0.0
        %563 = vmatprep.subr.mxu0 0.0
        %564 = vmatpush1.xpose.msra.mxu0 0.0
        %565 = vmatprep.subr.mxu0 0.0
        %566 = vmatpush1.xpose.msra.mxu0 0.0
        %567 = vmatprep.subr.mxu0 0.0
        %568 = vmatpush1.xpose.msra.mxu0 0.0
        %569 = vmatprep.subr.mxu0 0.0
        %570 = vmatpush1.xpose.msra.mxu0 0.0
        %571 = vmatprep.subr.mxu0 0.0
        %572 = vmatpush1.xpose.msra.mxu0 0.0
        %573 = vmatprep.subr.mxu0 0.0
        %574 = vmatpush1.xpose.msra.mxu0 0.0
        %575 = vmatprep.subr.mxu0 0.0
        %576 = vmatpush1.xpose.msra.mxu0 0.0
        %577 = vmatprep.subr.mxu0 0.0
        %578 = vmatpush1.xpose.msra.mxu0 0.0
        %579 = vmatprep.subr.mxu0 0.0
        %580 = vmatpush1.xpose.msra.mxu0 0.0
        %581 = vmatprep.subr.mxu0 0.0
        %582 = vmatpush1.xpose.msra.mxu0 0.0
        %583 = vmatprep.subr.mxu0 0.0
        %584 = vmatpush1.xpose.msra.mxu0 0.0
        %585 = vmatprep.subr.mxu0 0.0
        %586 = vmatpush1.xpose.msra.mxu0 0.0
        %587 = vmatprep.subr.mxu0 0.0
        %588 = vmatpush1.xpose.msra.mxu0 0.0
        %589 = vmatprep.subr.mxu0 0.0
        %590 = vmatpush1.xpose.msra.mxu0 0.0
        %591 = vmatprep.subr.mxu0 0.0
        %592 = vmatpush1.xpose.msra.mxu0 0.0
        %593 = vmatprep.subr.mxu0 0.0
        %594 = vmatpush1.xpose.msra.mxu0 0.0
        %595 = vmatprep.mubr.f32.mxu0 0.0
        %v596 = vand.u32 %v154, 4294901760
        %597 = vmatmul.mubr.f32.gmra.mrb[0].mxu0 %v596
        %v598 = vpop.f32.mrb[0].mxu0
        %v599 = vadd.f32 %v527, %v598
        %v600 = vpop.f32.mrb[0].mxu0
        %601 = vdwg.mxu0
        %v602 = vadd.f32 %v155, %v599
        %vm603 = vcmask 64512
        %604 = vst.msk [vmem:[#allocation2] sm:$0xff] %vm603, %v602
        // Predicated region
        $region33: #{tpu_custom_call.1} parent=23 // pred_check
          %p605 = pneg %p148
        $region34: #{tpu_custom_call.1} parent=23 // pred_check_branch
          %607 = sbr.rel (%p605) target = $region36
        $region35: #{tpu_custom_call.1} parent=23 // pred_region
          %v608 = vld [vmem:[#allocation2] sm:$0xff]
          %609 = vst.msk [vmem:[%s146] sm:$0xff] %vm603, %v608
        $region36: #{tpu_custom_call.1} parent=23 // pred_fallthru
          _
        %s610 = sand.u32 %s66, 1
        %s611 = scalar_lea.sflag [#allocation5], %s610
        %s612 = sand.u32 %s66, 1
        %s613 = smul.addr %s612, 8
        %s614 = scalar_lea.vmem [#allocation6], %s613
        // Predicated region
        $region37: #{tpu_custom_call.1} parent=23 // pred_check
          %p615 = pneg %p76
        $region38: #{tpu_custom_call.1} parent=23 // pred_check_branch
          %617 = sbr.rel (%p615) target = $region40
        $region39: #{tpu_custom_call.1} parent=23 // pred_region
          %s619 = ssub.s32 128, 128
          %620 = vsyncadd %s611, %s619
          %s621 = smul.addr %s22, 128
          %s622 = scalar_lea.hbm %s1, %s621
          %s624 = sshll.u32 %s614, 4
          %s625 = int_to_ptr.vmem [resolvable:$true] %s624
          %627 = dma.vmem_to_hbm [thread:$0]  %s625, 128, %s622, %s611
        $region40: #{tpu_custom_call.1} parent=23 // pred_fallthru
          _
      $region24: #{tpu_custom_call.1} parent=5 // pred_fallthru
        _
      %p628 = scmp.le.s32.totalorder 2, %s13
      // Predicated region
      $region41: #{tpu_custom_call.1} parent=5 // pred_check
        %p629 = pneg %p628
      $region42: #{tpu_custom_call.1} parent=5 // pred_check_branch
        %631 = sbr.rel (%p629) target = $region44
      $region43: #{tpu_custom_call.1} parent=5 // pred_region
        %s632 = ssub.s32 %s13, 2
        // Predicated region
        $region45: #{tpu_custom_call.1} parent=43 // pred_check
          %p633 = pneg %p82
        $region46: #{tpu_custom_call.1} parent=43 // pred_check_branch
          %635 = sbr.rel (%p633) target = $region48
        $region47: #{tpu_custom_call.1} parent=43 // pred_region
          %s636 = sand.u32 %s67, 1
          %s637 = scalar_lea.sflag [#allocation5], %s636
          %s638 = sand.u32 %s67, 1
          %s639 = smul.addr %s638, 8
          %s640 = scalar_lea.vmem [#allocation6], %s639
          %641 = dma.done %s637, 128
        $region48: #{tpu_custom_call.1} parent=43 // pred_fallthru
          _
      $region44: #{tpu_custom_call.1} parent=5 // pred_fallthru
        _
    $region6: #{tpu_custom_call.1} parent=1 // loop_footer
      %s17 = sadd.s32 1, %s13
    $region7: #{tpu_custom_call.1} parent=1 // loop_footer_branch
      %12 = sbr.rel target = $region3
    $region8: #{tpu_custom_call.1} parent=1 // loop_exit
      _
    %642 = vsyncpa [#allocation4], 1
    %s643 = scalar_lea.sflag [#allocation4], 1
    %644 = vsyncpa %s643, 1
    %645 = vsyncpa [#allocation5], 1
    %s646 = scalar_lea.sflag [#allocation5], 1
    %647 = vsyncpa %s646, 1

</llo_original>
